<compile_context>
chip_gen: v7x
topology: tpu7x:2x2x1
jax: 0.10.0
libtpu: 0.0.40
codegen_flags: <defaults>
</compile_context>

<pallas_src>
import jax
import jax.numpy as jnp
from jax import lax
from jax.experimental import pallas as pl
from jax.experimental.pallas import tpu as pltpu

LEAKY_SLOPE = 0.01  # nn.LeakyReLU() default negative_slope


def basic_conv_kernel(p_ref, w_ref, b_ref, o_ref):
    """Fused im2col-matmul conv + folded-BN shift + LeakyReLU, one (batch, spatial-tile) step.

    p_ref: (1, K, TM)    bf16 im2col patches; K = KH*KW*Cin (sublanes), TM spatial (lanes)
    w_ref: (Cout, K)     bf16 conv weight with the BN scale pre-folded (resident)
    b_ref: (Cout, 1)     f32 folded BN shift (resident)
    o_ref: (1, Cout, TM) f32 channel-major, lane-dense output tile
    """
    # Single MXU matmul: bf16 operands, f32 accumulation. Result (Cout, TM) is lane-dense.
    acc = jnp.dot(w_ref[...], p_ref[0], preferred_element_type=jnp.float32)
    y = acc + b_ref[...]                                   # folded BN shift (broadcast on lanes)
    o_ref[0] = jnp.where(y > 0, y, LEAKY_SLOPE * y).astype(o_ref.dtype)


def _pick_spatial_tile(M, n_batch):
    """Largest lane-dense (multiple-of-128) tile dividing M that still leaves >=4 grid steps."""
    if M % 128 != 0:
        return M                                            # full-dim block (legal), single tile
    cands = [c for c in (2048, 1024, 512, 256, 128) if M % c == 0]
    for c in cands:
        if (M // c) * n_batch >= 4:                         # keep some pipeline depth
            return c
    return cands[-1]


def basic_conv(x_nchw, weight_oihw, gamma, beta, running_mean, running_var,
               *, eps=1e-5, stride=1, padding=1):
    """NCHW in / NCHW out wrapper around the fused Pallas kernel."""
    N, Cin, H, W = x_nchw.shape
    Cout, w_cin, KH, KW = weight_oihw.shape
    assert w_cin == Cin, "groups != 1 not supported"

    Hp, Wp = H + 2 * padding, W + 2 * padding
    Ho = (Hp - KH) // stride + 1
    Wo = (Wp - KW) // stride + 1
    K = KH * KW * Cin
    M = Ho * Wo

    # ---- wrapper-side glue (layout plumbing only, tiny at these shapes) ----
    # BN folding: scale goes into the f32 weight (then a single bf16 cast), shift stays f32.
    scale = gamma / jnp.sqrt(running_var + eps)
    shift = (beta - running_mean * scale).astype(jnp.float32).reshape(Cout, 1)
    w_mat = jnp.transpose(weight_oihw, (0, 2, 3, 1)).reshape(Cout, K)      # K order = (kh, kw, cin)
    w_mat = (w_mat.astype(jnp.float32) * scale[:, None]).astype(jnp.bfloat16)

    # im2col hoisted to the wrapper: (N, K, M) with spatial on the contiguous lane axis.
    x_pad = jnp.pad(x_nchw, ((0, 0), (0, 0), (padding, padding), (padding, padding)))
    x_pad = x_pad.astype(jnp.bfloat16)                                      # halve matmul-input bytes
    slabs = [x_pad[:, :, kh:kh + stride * Ho:stride, kw:kw + stride * Wo:stride]
             for kh in range(KH) for kw in range(KW)]                       # each (N, Cin, Ho, Wo)
    patches = jnp.stack(slabs, axis=1).reshape(N, K, M)                     # K order = (kh, kw, cin)

    TM = _pick_spatial_tile(M, N)
    grid = (N, M // TM)

    out = pl.pallas_call(
        basic_conv_kernel,
        out_shape=jax.ShapeDtypeStruct((N, Cout, M), jnp.float32),
        grid_spec=pltpu.PrefetchScalarGridSpec(
            num_scalar_prefetch=0,
            grid=grid,
            in_specs=[
                pl.BlockSpec((1, K, TM), lambda n, m: (n, 0, m)),   # patches tile
                pl.BlockSpec((Cout, K), lambda n, m: (0, 0)),       # resident weight
                pl.BlockSpec((Cout, 1), lambda n, m: (0, 0)),       # resident BN shift
            ],
            out_specs=pl.BlockSpec((1, Cout, TM), lambda n, m: (n, 0, m)),
        ),
        compiler_params=pltpu.CompilerParams(
            dimension_semantics=("parallel", "parallel")),          # megacore over batch & space
    )(patches, w_mat, shift)

    # Kernel already wrote channel-major -> NCHW is a free reshape (no transpose pass).
    return out.reshape(N, Cout, Ho, Wo)


def reference(x_nchw, weight_oihw, gamma, beta, running_mean, running_var,
              *, eps=1e-5, stride=1, padding=1):
    """Pure-JAX f32 reference (conv + eval-mode BN + LeakyReLU)."""
    y = lax.conv_general_dilated(
        x_nchw, weight_oihw,
        window_strides=(stride, stride),
        padding=((padding, padding), (padding, padding)),
        dimension_numbers=("NCHW", "OIHW", "NCHW"))
    scale = gamma / jnp.sqrt(running_var + eps)
    shift = beta - running_mean * scale
    y = y * scale[None, :, None, None] + shift[None, :, None, None]
    return jnp.where(y > 0, y, LEAKY_SLOPE * y)


if __name__ == "__main__":
    key = jax.random.PRNGKey(0)
    k_x, k_w, k_g, k_b, k_m, k_v = jax.random.split(key, 6)

    N, Cin, H, W = 2, 4, 16, 16
    Cout, KH, KW = 8, 3, 3

    x = jax.random.normal(k_x, (N, Cin, H, W), dtype=jnp.float32)
    weight = jax.random.normal(k_w, (Cout, Cin, KH, KW), dtype=jnp.float32) * 0.1
    gamma = 1.0 + 0.1 * jax.random.normal(k_g, (Cout,), dtype=jnp.float32)
    beta = 0.1 * jax.random.normal(k_b, (Cout,), dtype=jnp.float32)
    running_mean = 0.1 * jax.random.normal(k_m, (Cout,), dtype=jnp.float32)
    running_var = jnp.abs(1.0 + 0.1 * jax.random.normal(k_v, (Cout,), dtype=jnp.float32))

    out = basic_conv(x, weight, gamma, beta, running_mean, running_var)
    out = jax.block_until_ready(out)

    ref = jax.block_until_ready(
        reference(x, weight, gamma, beta, running_mean, running_var))
    assert out.shape == (N, Cout, H, W), out.shape
    # bf16 matmul operands with f32 accumulation over K=36 -> tightened tolerance.
    assert jnp.allclose(out, ref, atol=2e-2, rtol=2e-2), float(jnp.max(jnp.abs(out - ref)))

    print("KERNEL_OK")
</pallas_src>

<mosaic_0001>
module attributes {stable_mosaic.version = 11 : i64} {
  func.func @basic_conv_kernel(%arg0: i32, %arg1: i32, %arg2: memref<1x36x128xbf16, #tpu.memory_space<vmem>>, %arg3: memref<8x36xbf16, #tpu.memory_space<vmem>>, %arg4: memref<8x1xf32, #tpu.memory_space<vmem>>, %arg5: memref<1x8x128xf32, #tpu.memory_space<vmem>>) attributes {dimension_semantics = [#tpu.dimension_semantics<parallel>, #tpu.dimension_semantics<parallel>], iteration_bounds = array<i64: 2, 2>, scalar_prefetch = 0 : i64, scratch_operands = 0 : i64, tpu.core_type = #tpu.core_type<tc>, window_params = [{transform_indices = @transform_0, window_bounds = array<i64: 1, 36, 128>}, {pipeline_mode = #tpu.pipeline_mode<synchronous>, transform_indices = @transform_1, window_bounds = array<i64: 8, 36>}, {pipeline_mode = #tpu.pipeline_mode<synchronous>, transform_indices = @transform_2, window_bounds = array<i64: 8, 1>}, {transform_indices = @transform_3, window_bounds = array<i64: 1, 8, 128>}]} {
    %c0 = arith.constant 0 : index
    %c0_0 = arith.constant 0 : index
    %0 = vector.load %arg3[%c0, %c0_0] : memref<8x36xbf16, #tpu.memory_space<vmem>>, vector<8x36xbf16>
    %c0_1 = arith.constant 0 : index
    %c0_2 = arith.constant 0 : index
    %c0_3 = arith.constant 0 : index
    %1 = vector.load %arg2[%c0_1, %c0_2, %c0_3] : memref<1x36x128xbf16, #tpu.memory_space<vmem>>, vector<1x36x128xbf16>
    %2 = vector.shape_cast %1 : vector<1x36x128xbf16> to vector<36x128xbf16>
    %cst = arith.constant dense<0.000000e+00> : vector<8x128xf32>
    %3 = tpu.matmul %0, %2, %cst {dimension_numbers = #tpu.dot_dimension_numbers<[1], [0], [0], [1], [0, 0, 1, 1], [], []>} : vector<8x36xbf16>, vector<36x128xbf16>, vector<8x128xf32> -> vector<8x128xf32>
    %c0_4 = arith.constant 0 : index
    %c0_5 = arith.constant 0 : index
    %4 = vector.load %arg4[%c0_4, %c0_5] : memref<8x1xf32, #tpu.memory_space<vmem>>, vector<8x1xf32>
    %5 = vector.broadcast %4 : vector<8x1xf32> to vector<8x128xf32>
    %6 = arith.addf %3, %5 : vector<8x128xf32>
    %cst_6 = arith.constant 0.000000e+00 : f32
    %7 = vector.broadcast %cst_6 : f32 to vector<8x128xf32>
    %8 = arith.cmpf ogt, %6, %7 : vector<8x128xf32>
    %cst_7 = arith.constant 0.00999999977 : f32
    %9 = vector.broadcast %cst_7 : f32 to vector<8x128xf32>
    %10 = arith.mulf %9, %6 : vector<8x128xf32>
    %11 = arith.select %8, %6, %10 : vector<8x128xi1>, vector<8x128xf32>
    %c0_8 = arith.constant 0 : index
    %c0_9 = arith.constant 0 : index
    %c0_10 = arith.constant 0 : index
    %12 = vector.load %arg5[%c0_8, %c0_9, %c0_10] : memref<1x8x128xf32, #tpu.memory_space<vmem>>, vector<1x8x128xf32>
    %13 = vector.shape_cast %12 : vector<1x8x128xf32> to vector<8x128xf32>
    %14 = vector.shape_cast %11 : vector<8x128xf32> to vector<1x8x128xf32>
    tpu.vector_store %arg5[%c0_8, %c0_9, %c0_10], %14 {strides = array<i32>} : memref<1x8x128xf32, #tpu.memory_space<vmem>>, vector<1x8x128xf32>,
    return
  }
  func.func @transform_0(%arg0: i32, %arg1: i32) -> (i32, i32, i32) {
    %c0_i32 = arith.constant 0 : i32
    %c0_i32_0 = arith.constant 0 : i32
    return %arg0, %c0_i32, %arg1 : i32, i32, i32
  }
  func.func @transform_1(%arg0: i32, %arg1: i32) -> (i32, i32) {
    %c0_i32 = arith.constant 0 : i32
    %c0_i32_0 = arith.constant 0 : i32
    %c0_i32_1 = arith.constant 0 : i32
    return %c0_i32, %c0_i32_0 : i32, i32
  }
  func.func @transform_2(%arg0: i32, %arg1: i32) -> (i32, i32) {
    %c0_i32 = arith.constant 0 : i32
    %c0_i32_0 = arith.constant 0 : i32
    %c0_i32_1 = arith.constant 0 : i32
    return %c0_i32, %c0_i32_0 : i32, i32
  }
  func.func @transform_3(%arg0: i32, %arg1: i32) -> (i32, i32, i32) {
    %c0_i32 = arith.constant 0 : i32
    %c0_i32_0 = arith.constant 0 : i32
    return %arg0, %c0_i32, %arg1 : i32, i32, i32
  }
}

</mosaic_0001>

<llo_original>
// kernel: tpu_custom_call.1
$region0: #{tpu_custom_call.1}
  #allocation0 [shape = 'u32[]', space=smem, size = 0x4, offset = 0x4, fixed_abs, tag = 'smem constant byte address 0x4 - core index']
  #allocation1 [shape = 'u32[144,128]{1,0:T(1,128)}', space=vmem, size = 0x12000, scoped, tag = 'internal scratch']
  %s0 = inlined_call_operand.vmem [shape: bf16[2,36,256], index: 0, kind: input, shape index: {}]
  %s1 = inlined_call_operand.vmem [shape: bf16[8,36], index: 1, kind: input, shape index: {}]
  %s2 = inlined_call_operand.vmem [shape: f32[8,1], index: 2, kind: input, shape index: {}]
  %s3 = inlined_call_operand.hbm [shape: f32[2,8,256], index: 3, kind: output, shape index: {}]
  %s4 = sld [smem:[#allocation0]]
  $region86: #{tpu_custom_call.1} parent=0
    _
  %s6 = ssub.s32 1, %s4
  %s7 = scalar_select 0, %s6, %s4
  $region1: #{tpu_custom_call.1} parent=0
    #allocation2 [shape = 'u8[20480]{0}', space=vmem, size = 0x5000, scoped, tag = 'input window, operand 0']
    #allocation3 [shape = 'u8[8192]{0}', space=vmem, size = 0x2000, scoped, tag = 'output window, operand 0']
    #allocation4 [shape = 's32[2]{0}', space=sflag, size = 0x8, scoped, tag = 'scoped memory for tpu_custom_call.1']
    %8 = vsyncpa [#allocation4], 0
    %s9 = scalar_lea.sflag [#allocation4], 1
    %10 = vsyncpa %s9, 0
    loop: start=0, step=1, limit=6
    $region2: #{tpu_custom_call.1} parent=1 // loop_pre_header
      _
    $region3: #{tpu_custom_call.1} parent=1 // loop_header
      %s12 = sphi 0, %s16
      %p13 = scmp.ge.s32.totalorder %s12, 6
      %s19 = sphi 0, %s31
      %s20 = sphi 0, %s27
      %s21 = sphi 0, %s19
      %s22 = sphi 0, %s20
      %s23 = sphi 0, %s21
      %s24 = sphi 0, %s22
      %s36 = sphi 0, %s38
      %s39 = sphi 0, %s36
      %s40 = sphi 0, %s39
      %s56 = sphi 0, %s40
      %s60 = sphi 0, %s60
      %s62 = sphi 0, %s60
      %s63 = sphi 0, %s62
      %s77 = sphi 0, %s63
      %s81 = sphi 0, %s81
      %s83 = sphi 0, %s81
      %s84 = sphi 0, %s83
      %s98 = sphi 0, %s84
      %s106 = sphi 0, %s108
      %s109 = sphi 0, %s106
      %s110 = sphi 0, %s109
      %s126 = sphi 0, %s110
    $region4: #{tpu_custom_call.1} parent=1 // loop_header_branch
      %15 = sbr.rel (%p13) target = $region8
    $region5: #{tpu_custom_call.1} parent=1 // loop_body
      %s17 = ssub.s32 %s12, 1
      %s18 = ssub.s32 %s12, 2
      %s25 = sadd.s32 1, %s20
      %p26 = scmp.ge.s32.totalorder %s25, 2
      %s27 = scalar_select %p26, 0, %s25
      %s28 = sadd.s32 1, %s19
      %s29 = scalar_select %p26, %s28, %s19
      %p30 = scmp.ge.s32.totalorder %s29, 2
      %s31 = scalar_select %p30, 0, %s29
      %s32 = ssub.s32 %s19, %s31
      %s33 = ssub.s32 %s20, %s27
      %s34 = sor.u32 %s32, %s33
      %p35 = scmp.eq.s32.totalorder %s34, 0
      %s37 = sadd.s32 %s36, 1
      %s38 = scalar_select %p35, %s36, %s37
      %p41 = pneg %p35
      %p42 = scmp.eq.s32.totalorder %s12, 3
      %p43 = por %p41, %p42
      %p44 = scmp.ne.s32.totalorder %s36, %s39
      %p45 = scmp.eq.s32.totalorder %s12, 0
      %p46 = por %p44, %p45
      %p47 = scmp.ne.s32.totalorder %s36, %s39
      %p48 = scmp.eq.s32.totalorder %s17, 3
      %p49 = por %p47, %p48
      %p50 = scmp.ne.s32.totalorder %s39, %s40
      %p51 = scmp.eq.s32.totalorder %s17, 0
      %p52 = por %p50, %p51
      %p53 = scmp.ne.s32.totalorder %s39, %s40
      %p54 = scmp.eq.s32.totalorder %s18, 3
      %p55 = por %p53, %p54
      %p57 = scmp.ne.s32.totalorder %s40, %s56
      %p58 = scmp.eq.s32.totalorder %s18, 0
      %p59 = por %p57, %p58
      %s61 = sadd.s32 %s60, 1
      %p64 = scmp.eq.s32.totalorder %s12, 3
      %p65 = scmp.ne.s32.totalorder %s60, %s62
      %p66 = scmp.eq.s32.totalorder %s12, 0
      %p67 = por %p65, %p66
      %p68 = scmp.ne.s32.totalorder %s60, %s62
      %p69 = scmp.eq.s32.totalorder %s17, 3
      %p70 = por %p68, %p69
      %p71 = scmp.ne.s32.totalorder %s62, %s63
      %p72 = scmp.eq.s32.totalorder %s17, 0
      %p73 = por %p71, %p72
      %p74 = scmp.ne.s32.totalorder %s62, %s63
      %p75 = scmp.eq.s32.totalorder %s18, 3
      %p76 = por %p74, %p75
      %p78 = scmp.ne.s32.totalorder %s63, %s77
      %p79 = scmp.eq.s32.totalorder %s18, 0
      %p80 = por %p78, %p79
      %s82 = sadd.s32 %s81, 1
      %p85 = scmp.eq.s32.totalorder %s12, 3
      %p86 = scmp.ne.s32.totalorder %s81, %s83
      %p87 = scmp.eq.s32.totalorder %s12, 0
      %p88 = por %p86, %p87
      %p89 = scmp.ne.s32.totalorder %s81, %s83
      %p90 = scmp.eq.s32.totalorder %s17, 3
      %p91 = por %p89, %p90
      %p92 = scmp.ne.s32.totalorder %s83, %s84
      %p93 = scmp.eq.s32.totalorder %s17, 0
      %p94 = por %p92, %p93
      %p95 = scmp.ne.s32.totalorder %s83, %s84
      %p96 = scmp.eq.s32.totalorder %s18, 3
      %p97 = por %p95, %p96
      %p99 = scmp.ne.s32.totalorder %s84, %s98
      %p100 = scmp.eq.s32.totalorder %s18, 0
      %p101 = por %p99, %p100
      %s102 = ssub.s32 %s19, %s31
      %s103 = ssub.s32 %s20, %s27
      %s104 = sor.u32 %s102, %s103
      %p105 = scmp.eq.s32.totalorder %s104, 0
      %s107 = sadd.s32 %s106, 1
      %s108 = scalar_select %p105, %s106, %s107
      %p111 = pneg %p105
      %p112 = scmp.eq.s32.totalorder %s12, 3
      %p113 = por %p111, %p112
      %p114 = scmp.ne.s32.totalorder %s106, %s109
      %p115 = scmp.eq.s32.totalorder %s12, 0
      %p116 = por %p114, %p115
      %p117 = scmp.ne.s32.totalorder %s106, %s109
      %p118 = scmp.eq.s32.totalorder %s17, 3
      %p119 = por %p117, %p118
      %p120 = scmp.ne.s32.totalorder %s109, %s110
      %p121 = scmp.eq.s32.totalorder %s17, 0
      %p122 = por %p120, %p121
      %p123 = scmp.ne.s32.totalorder %s109, %s110
      %p124 = scmp.eq.s32.totalorder %s18, 3
      %p125 = por %p123, %p124
      %p127 = scmp.ne.s32.totalorder %s110, %s126
      %p128 = scmp.eq.s32.totalorder %s18, 0
      %p129 = por %p127, %p128
      %p130 = scmp.le.s32.totalorder 1, %s12
      %p131 = scmp.lt.s32.totalorder %s12, 5
      %p132 = pnand %p130, %p131
      %p133 = pneg %p132
      // Predicated region
      $region9: #{tpu_custom_call.1} parent=5 // pred_check
        _
      $region10: #{tpu_custom_call.1} parent=5 // pred_check_branch
        %135 = sbr.rel (%p132) target = $region12
      $region11: #{tpu_custom_call.1} parent=5 // pred_region
        %s136 = ssub.s32 %s12, 1
        // Predicated region
        $region13: #{tpu_custom_call.1} parent=11 // pred_check
          %p137 = pneg %p73
        $region14: #{tpu_custom_call.1} parent=11 // pred_check_branch
          %139 = sbr.rel (%p137) target = $region16
        $region15: #{tpu_custom_call.1} parent=11 // pred_region
          _
        $region16: #{tpu_custom_call.1} parent=11 // pred_fallthru
          _
        // Predicated region
        $region17: #{tpu_custom_call.1} parent=11 // pred_check
          %p140 = pneg %p94
        $region18: #{tpu_custom_call.1} parent=11 // pred_check_branch
          %142 = sbr.rel (%p140) target = $region20
        $region19: #{tpu_custom_call.1} parent=11 // pred_region
          _
        $region20: #{tpu_custom_call.1} parent=11 // pred_fallthru
          _
      $region12: #{tpu_custom_call.1} parent=5 // pred_fallthru
        _
      %p143 = scmp.lt.s32.totalorder %s12, 4
      // Predicated region
      $region21: #{tpu_custom_call.1} parent=5 // pred_check
        %p144 = pneg %p143
      $region22: #{tpu_custom_call.1} parent=5 // pred_check_branch
        %146 = sbr.rel (%p144) target = $region24
      $region23: #{tpu_custom_call.1} parent=5 // pred_region
        // Predicated region
        $region25: #{tpu_custom_call.1} parent=23 // pred_check
          %p147 = pneg %p46
        $region26: #{tpu_custom_call.1} parent=23 // pred_check_branch
          %149 = sbr.rel (%p147) target = $region28
        $region27: #{tpu_custom_call.1} parent=23 // pred_region
          %s150 = sand.u32 %s36, 1
          %s151 = sand.u32 %s36, 1
          %s152 = smul.addr %s151, 20
          %s153 = scalar_lea.vmem [#allocation2], %s152
          %s154 = smul.addr %s19, 10
          %s155 = sadd.s32 %s20, %s154
          %s156 = smul.addr %s155, 4
          %s157 = scalar_lea.vmem %s0, %s156
          // Predicated region
          $region29: #{tpu_custom_call.1} parent=27 // pred_check
            _
          $region30: #{tpu_custom_call.1} parent=27 // pred_check_branch
            %159 = sbr.rel (0) target = $region32
          $region31: #{tpu_custom_call.1} parent=27 // pred_region
            // Predicated region
            $region33: #{tpu_custom_call.1} parent=31 // pred_check
              _
            $region34: #{tpu_custom_call.1} parent=31 // pred_check_branch
              %161 = sbr.rel target = $region36
            $region35: #{tpu_custom_call.1} parent=31 // pred_region
              // Predicated region
              $region48: #{tpu_custom_call.1} parent=35 // pred_check
                _
              $region49: #{tpu_custom_call.1} parent=35 // pred_check_branch
                %184 = sbr.rel (0) target = $region51
              $region50: #{tpu_custom_call.1} parent=35 // pred_region
                loop: start=0, step=1, limit=1
                $region52: #{tpu_custom_call.1} parent=50 // loop_pre_header
                  _
                $region53: #{tpu_custom_call.1} parent=50 // loop_header
                  %s186 = sphi 0, %s190
                  %p187 = scmp.ge.s32.totalorder %s186, 1
                  %s191 = sphi %s157, %s157
                  %s192 = sphi %s153, %s153
                $region54: #{tpu_custom_call.1} parent=50 // loop_header_branch
                  %189 = sbr.rel (%p187) target = $region58
                $region55: #{tpu_custom_call.1} parent=50 // loop_body
                  _
                $region56: #{tpu_custom_call.1} parent=50 // loop_footer
                  %s190 = sadd.s32 1, %s186
                $region57: #{tpu_custom_call.1} parent=50 // loop_footer_branch
                  %185 = sbr.rel target = $region53
                $region58: #{tpu_custom_call.1} parent=50 // loop_exit
                  _
                loop: start=0, step=1, limit=1
                $region59: #{tpu_custom_call.1} parent=50 // loop_pre_header
                  _
                $region60: #{tpu_custom_call.1} parent=50 // loop_header
                  %s195 = sphi 0, %s199
                  %p196 = scmp.ge.s32.totalorder %s195, 1
                  %s200 = sphi %s157, %s157
                  %s201 = sphi %s153, %s153
                $region61: #{tpu_custom_call.1} parent=50 // loop_header_branch
                  %198 = sbr.rel (%p196) target = $region65
                $region62: #{tpu_custom_call.1} parent=50 // loop_body
                  %v202 = vld [vmem:[%s200] sm:$0xf]
                  %203 = vst [vmem:[%s201] sm:$0xf] %v202
                  %v204 = vld [vmem:[%s200 + $0x8] sm:$0xf]
                  %205 = vst [vmem:[%s201 + $0x4] sm:$0xf] %v204
                  %v206 = vld [vmem:[%s200 + $0x10] sm:$0xf]
                  %207 = vst [vmem:[%s201 + $0x8] sm:$0xf] %v206
                  %v208 = vld [vmem:[%s200 + $0x18] sm:$0xf]
                  %209 = vst [vmem:[%s201 + $0xc] sm:$0xf] %v208
                  %v210 = vld [vmem:[%s200 + $0x20] sm:$0xf]
                  %211 = vst [vmem:[%s201 + $0x10] sm:$0xf] %v210
                $region63: #{tpu_custom_call.1} parent=50 // loop_footer
                  %s199 = sadd.s32 1, %s195
                $region64: #{tpu_custom_call.1} parent=50 // loop_footer_branch
                  %194 = sbr.rel target = $region60
                $region65: #{tpu_custom_call.1} parent=50 // loop_exit
                  _
              $region51: #{tpu_custom_call.1} parent=35 // pred_fallthru
                _
            $region36: #{tpu_custom_call.1} parent=31 // pred_fallthru
              _
            // Predicated region
            $region37: #{tpu_custom_call.1} parent=31 // pred_check
              _
            $region38: #{tpu_custom_call.1} parent=31 // pred_check_branch
              %163 = sbr.rel (0) target = $region40
            $region39: #{tpu_custom_call.1} parent=31 // pred_region
              loop: start=0, step=1, limit=1
              $region41: #{tpu_custom_call.1} parent=39 // loop_pre_header
                _
              $region42: #{tpu_custom_call.1} parent=39 // loop_header
                %s166 = sphi 0, %s170
                %p167 = scmp.ge.s32.totalorder %s166, 1
                %s171 = sphi %s157, %s157
                %s172 = sphi %s153, %s153
              $region43: #{tpu_custom_call.1} parent=39 // loop_header_branch
                %169 = sbr.rel (%p167) target = $region47
              $region44: #{tpu_custom_call.1} parent=39 // loop_body
                %v173 = vld [vmem:[%s171] sm:$0xf]
                %174 = vst [vmem:[%s172] sm:$0xf] %v173
                %v175 = vld [vmem:[%s171 + $0x8] sm:$0xf]
                %176 = vst [vmem:[%s172 + $0x4] sm:$0xf] %v175
                %v177 = vld [vmem:[%s171 + $0x10] sm:$0xf]
                %178 = vst [vmem:[%s172 + $0x8] sm:$0xf] %v177
                %v179 = vld [vmem:[%s171 + $0x18] sm:$0xf]
                %180 = vst [vmem:[%s172 + $0xc] sm:$0xf] %v179
                %v181 = vld [vmem:[%s171 + $0x20] sm:$0xf]
                %182 = vst [vmem:[%s172 + $0x10] sm:$0xf] %v181
              $region45: #{tpu_custom_call.1} parent=39 // loop_footer
                %s170 = sadd.s32 1, %s166
              $region46: #{tpu_custom_call.1} parent=39 // loop_footer_branch
                %165 = sbr.rel target = $region42
              $region47: #{tpu_custom_call.1} parent=39 // loop_exit
                _
            $region40: #{tpu_custom_call.1} parent=31 // pred_fallthru
              _
          $region32: #{tpu_custom_call.1} parent=27 // pred_fallthru
            _
          %212 = vnop
        $region28: #{tpu_custom_call.1} parent=23 // pred_fallthru
          _
      $region24: #{tpu_custom_call.1} parent=5 // pred_fallthru
        _
      %p213 = scmp.le.s32.totalorder 1, %s12
      %p214 = scmp.lt.s32.totalorder %s12, 5
      %p215 = pnand %p213, %p214
      %p216 = pneg %p215
      // Predicated region
      $region66: #{tpu_custom_call.1} parent=5 // pred_check
        _
      $region67: #{tpu_custom_call.1} parent=5 // pred_check_branch
        %218 = sbr.rel (%p215) target = $region69
      $region68: #{tpu_custom_call.1} parent=5 // pred_region
        %s219 = ssub.s32 %s12, 1
        %s220 = sand.u32 %s39, 1
        %s221 = sand.u32 %s39, 1
        %s222 = smul.addr %s221, 20
        %s223 = scalar_lea.vmem [#allocation2], %s222
        // Predicated region
        $region70: #{tpu_custom_call.1} parent=68 // pred_check
          %p224 = pneg %p52
        $region71: #{tpu_custom_call.1} parent=68 // pred_check_branch
          %226 = sbr.rel (%p224) target = $region73
        $region72: #{tpu_custom_call.1} parent=68 // pred_region
          _
        $region73: #{tpu_custom_call.1} parent=68 // pred_fallthru
          _
        %s227 = sand.u32 %s39, 1
        %s228 = sand.u32 %s39, 1
        %s229 = smul.addr %s228, 20
        %s230 = scalar_lea.vmem [#allocation2], %s229
        %p231 = pneg %p52
        %p232 = pneg %p49
        %p233 = pneg %p73
        %p234 = pneg %p70
        %p235 = pneg %p94
        %p236 = pneg %p91
        %p237 = pneg %p122
        %p238 = pneg %p119
        %s239 = sand.u32 %s109, 1
        %s240 = scalar_lea.sflag [#allocation4], %s239
        %s241 = sand.u32 %s109, 1
        %s242 = smul.addr %s241, 8
        %s243 = scalar_lea.vmem [#allocation3], %s242
        %v245 = vld [vmem:[%s1] sm:$0xf]
        %v246 = vld [vmem:[%s223] sm:$0xf]
        %v247 = vld [vmem:[%s223 + $0x4] sm:$0xf]
        %v248 = vld [vmem:[%s223 + $0x8] sm:$0xf]
        %v249 = vld [vmem:[%s223 + $0xc] sm:$0xf]
        %v250 = vld [vmem:[%s223 + $0x10] sm:$0x3]
        %v251 = vld [vmem:[%s2] sm:$0xff]
        %253 = vset.pattern.permute.xlu0 0
        %254 = vperm.xlu0 %253, %v251
        %v255 = vpop.permute.xlu0 %254
        %v262 = vunpack.c.l.b16 %v246
        %v263 = vunpack.c.l.b16 %v247
        %v264 = vunpack.c.l.b16 %v248
        %v265 = vunpack.c.l.b16 %v249
        %v266 = vunpack.c.l.b16 %v250
        %v267 = vpack.c.b16 %v263, %v262
        %v268 = vpack.c.b16 %v265, %v264
        %v269 = vpack.c.b16 %v266, %v266
        %vm272 = vcmask 293888
        %v274 = vsel %vm272, %v245, 0
        %vm276 = vcmask 1041408
        %v278 = vsel %vm276, %v269, 0
        %280 = vmatprep.subr.bf16.mxu0 0
        %281 = vmatpush1.bf16.msra.mxu0 %v267
        %282 = vmatprep.subr.bf16.mxu0 0
        %283 = vmatpush1.bf16.msra.mxu0 %v268
        %284 = vmatprep.subr.bf16.mxu0 0
        %285 = vmatpush1.bf16.msra.mxu0 %v278
        %286 = vmatprep.subr.bf16.mxu0 0
        %287 = vmatpush1.bf16.msra.mxu0 0
        %288 = vmatprep.subr.bf16.mxu0 0
        %289 = vmatpush1.bf16.msra.mxu0 0
        %290 = vmatprep.subr.bf16.mxu0 0
        %291 = vmatpush1.bf16.msra.mxu0 0
        %292 = vmatprep.subr.bf16.mxu0 0
        %293 = vmatpush1.bf16.msra.mxu0 0
        %294 = vmatprep.subr.bf16.mxu0 0
        %295 = vmatpush1.bf16.msra.mxu0 0
        %296 = vmatprep.subr.bf16.mxu0 0
        %297 = vmatpush1.bf16.msra.mxu0 0
        %298 = vmatprep.subr.bf16.mxu0 0
        %299 = vmatpush1.bf16.msra.mxu0 0
        %300 = vmatprep.subr.bf16.mxu0 0
        %301 = vmatpush1.bf16.msra.mxu0 0
        %302 = vmatprep.subr.bf16.mxu0 0
        %303 = vmatpush1.bf16.msra.mxu0 0
        %304 = vmatprep.subr.bf16.mxu0 0
        %305 = vmatpush1.bf16.msra.mxu0 0
        %306 = vmatprep.subr.bf16.mxu0 0
        %307 = vmatpush1.bf16.msra.mxu0 0
        %308 = vmatprep.subr.bf16.mxu0 0
        %309 = vmatpush1.bf16.msra.mxu0 0
        %310 = vmatprep.subr.bf16.mxu0 0
        %311 = vmatpush1.bf16.msra.mxu0 0
        %312 = vmatprep.mubr.bf16.mxu0 0
        %313 = vmatmul.mubr.bf16.gmra.mrb[0].mxu0 %v274
        %v314 = vpop.f32.mrb[0].mxu0
        %v315 = vadd.f32 %v255, %v314
        %v316 = vpop.f32.mrb[0].mxu0
        %v317 = vpop.f32.mrb[0].mxu0
        %v318 = vpop.f32.mrb[0].mxu0
        %319 = vdwg.mxu0
        %vm320 = vcmp.gt.f32.partialorder %v315, 0.0
        %v321 = vmul.f32 %v315, 0.01
        %v322 = vsel %vm320, %v315, %v321
        %323 = vst [vmem:[%s243] sm:$0xff] %v322
        %s324 = sand.u32 %s109, 1
        %s325 = scalar_lea.sflag [#allocation4], %s324
        %s326 = sand.u32 %s109, 1
        %s327 = smul.addr %s326, 8
        %s328 = scalar_lea.vmem [#allocation3], %s327
        // Predicated region
        $region74: #{tpu_custom_call.1} parent=68 // pred_check
          %p329 = pneg %p119
        $region75: #{tpu_custom_call.1} parent=68 // pred_check_branch
          %331 = sbr.rel (%p329) target = $region77
        $region76: #{tpu_custom_call.1} parent=68 // pred_region
          %s333 = ssub.s32 128, 128
          %334 = vsyncadd %s325, %s333
          %s335 = smul.addr %s21, 2
          %s336 = sadd.s32 %s22, %s335
          %s337 = smul.addr %s336, 128
          %s338 = scalar_lea.hbm %s3, %s337
          %s340 = sshll.u32 %s328, 4
          %s341 = int_to_ptr.vmem [resolvable:$true] %s340
          %343 = dma.vmem_to_hbm [thread:$0]  %s341, 128, %s338, %s325
        $region77: #{tpu_custom_call.1} parent=68 // pred_fallthru
          _
      $region69: #{tpu_custom_call.1} parent=5 // pred_fallthru
        _
      %p344 = scmp.le.s32.totalorder 2, %s12
      // Predicated region
      $region78: #{tpu_custom_call.1} parent=5 // pred_check
        %p345 = pneg %p344
      $region79: #{tpu_custom_call.1} parent=5 // pred_check_branch
        %347 = sbr.rel (%p345) target = $region81
      $region80: #{tpu_custom_call.1} parent=5 // pred_region
        %s348 = ssub.s32 %s12, 2
        // Predicated region
        $region82: #{tpu_custom_call.1} parent=80 // pred_check
          %p349 = pneg %p125
        $region83: #{tpu_custom_call.1} parent=80 // pred_check_branch
          %351 = sbr.rel (%p349) target = $region85
        $region84: #{tpu_custom_call.1} parent=80 // pred_region
          %s352 = sand.u32 %s110, 1
          %s353 = scalar_lea.sflag [#allocation4], %s352
          %s354 = sand.u32 %s110, 1
          %s355 = smul.addr %s354, 8
          %s356 = scalar_lea.vmem [#allocation3], %s355
          %357 = dma.done %s353, 128
        $region85: #{tpu_custom_call.1} parent=80 // pred_fallthru
          _
      $region81: #{tpu_custom_call.1} parent=5 // pred_fallthru
        _
    $region6: #{tpu_custom_call.1} parent=1 // loop_footer
      %s16 = sadd.s32 1, %s12
    $region7: #{tpu_custom_call.1} parent=1 // loop_footer_branch
      %11 = sbr.rel target = $region3
    $region8: #{tpu_custom_call.1} parent=1 // loop_exit
      _
    %358 = vsyncpa [#allocation4], 1
    %s359 = scalar_lea.sflag [#allocation4], 1
    %360 = vsyncpa %s359, 1

</llo_original>
